<compile_context>
chip_gen: v5e
topology: v5e:2x2
jax: 0.10.0
libtpu: 0.0.40
codegen_flags: <defaults>
</compile_context>

<pallas_src>
import jax
import jax.numpy as jnp
from jax.experimental import pallas as pl
from jax.experimental.pallas import tpu as pltpu

LANE = 128  # TPU lane width; batch tiles are 128-aligned so every block is lane-dense.


def _round_up(n, m):
    return ((n + m - 1) // m) * m


def mlp_kernel(xt_ref, w1_ref, b1_ref, w2_ref, b2_ref, ot_ref):
    """One feature-major batch tile: y^T = W2 @ relu(W1 @ x^T + b1) + b2."""
    xt = xt_ref[...]                                                     # (D_in, TM)
    h = jnp.dot(w1_ref[...], xt, preferred_element_type=jnp.float32)     # (H, TM)
    h = jnp.maximum(h + b1_ref[...], 0.0)                                # bias + relu
    y = jnp.dot(w2_ref[...], h, preferred_element_type=jnp.float32)      # (D_out, TM)
    ot_ref[...] = (y + b2_ref[...]).astype(ot_ref.dtype)                 # lane-dense store


def prepare_params(w1, b1, w2, b2):
    """One-time parameter prep (call at model setup, NOT per forward).

    torch nn.Linear stores w as (out_features, in_features) — exactly the
    orientation the feature-major kernel consumes — so no transposes and no
    lane padding are needed: only dtype casts and column-vector biases.
    """
    w1 = jnp.asarray(w1, jnp.float32)                 # (H, D_in)
    b1 = jnp.asarray(b1, jnp.float32).reshape(-1, 1)  # (H, 1)
    w2 = jnp.asarray(w2, jnp.float32)                 # (D_out, H)
    b2 = jnp.asarray(b2, jnp.float32).reshape(-1, 1)  # (D_out, 1)
    return w1, b1, w2, b2


def simple_llm_lite_forward(x, params, *, block_m=2048):
    """x: (B, D_in) f32; params from prepare_params(). Returns (B, D_out) f32."""
    w1, b1, w2, b2 = params
    B, d_in = x.shape
    hidden = w1.shape[0]
    d_out = w2.shape[0]

    # Batch tile on the lane axis: as large as possible (fewer grid steps), but
    # capped so batches <= block_m still split into >= 2 balanced tiles for
    # v7x's two TensorCores.  128-aligned so every block is lane-dense.
    tm = min(block_m, max(LANE, _round_up(pl.cdiv(B, 2), LANE)))
    n_tiles = pl.cdiv(B, tm)
    b_pad = n_tiles * tm

    # Layout plumbing: present activations feature-major (D_in, b_pad).  The
    # transpose + tail-tile zero fill is one fused XLA pass (no separate
    # full-array jnp.pad copy); producers already holding feature-major
    # activations can call the pallas_call below directly and skip it.
    if b_pad == B:
        x_t = x.T
    else:
        x_t = jnp.zeros((d_in, b_pad), x.dtype).at[:, :B].set(x.T)

    flops = 2 * b_pad * (d_in * hidden + hidden * d_out) + b_pad * (hidden + d_out)
    bytes_accessed = 4 * (b_pad * (d_in + d_out)
                          + w1.size + b1.size + w2.size + b2.size)

    out_t = pl.pallas_call(
        mlp_kernel,
        out_shape=jax.ShapeDtypeStruct((d_out, b_pad), x.dtype),
        grid=(n_tiles,),
        in_specs=[
            # x^T: streamed, lane-dense (D_in == full array dim, TM % 128 == 0).
            pl.BlockSpec((d_in, tm), lambda i: (0, i)),
            # Weights / biases: tiny, VMEM-resident across all grid steps.
            pl.BlockSpec((hidden, d_in), lambda i: (0, 0)),
            pl.BlockSpec((hidden, 1), lambda i: (0, 0)),
            pl.BlockSpec((d_out, hidden), lambda i: (0, 0)),
            pl.BlockSpec((d_out, 1), lambda i: (0, 0)),
        ],
        # y^T: lane-dense store, no 128-lane feature padding (only 12 B/row).
        out_specs=pl.BlockSpec((d_out, tm), lambda i: (0, i)),
        compiler_params=pltpu.CompilerParams(
            # Batch tiles are independent -> shard across v7x's 2 TensorCores.
            dimension_semantics=("parallel",)),
        cost_estimate=pl.CostEstimate(
            flops=flops, transcendentals=0, bytes_accessed=bytes_accessed),
    )(x_t, w1, b1, w2, b2)

    # Back to the module's row-major (B, D_out) convention; tiny slice+transpose.
    return out_t[:, :B].T


if __name__ == "__main__":
    input_dim, hidden_dim, output_dim = 10, 20, 3

    key = jax.random.PRNGKey(0)
    kx, kw1, kb1, kw2, kb2, kx2 = jax.random.split(key, 6)

    # Deterministic synthetic parameters in torch nn.Linear layout.
    w1 = jax.random.normal(kw1, (hidden_dim, input_dim), dtype=jnp.float32) * 0.1
    b1 = jax.random.normal(kb1, (hidden_dim,), dtype=jnp.float32) * 0.1
    w2 = jax.random.normal(kw2, (output_dim, hidden_dim), dtype=jnp.float32) * 0.1
    b2 = jax.random.normal(kb2, (output_dim,), dtype=jnp.float32) * 0.1

    # One-time parameter prep (casts + column-vector biases; no transposes).
    params = prepare_params(w1, b1, w2, b2)

    def ref_forward(xs):
        return jnp.maximum(xs @ w1.T + b1, 0.0) @ w2.T + b2

    # Small batch: single 128-wide tile, padded batch columns sliced away.
    batch = 8
    x = jax.random.normal(kx, (batch, input_dim), dtype=jnp.float32)
    y = simple_llm_lite_forward(x, params)
    jax.block_until_ready(y)
    assert y.shape == (batch, output_dim)
    assert jnp.allclose(y, ref_forward(x), atol=1e-5, rtol=1e-5)

    # Larger, non-128-divisible batch: exercises the multi-tile grid (2 balanced
    # tiles for v7x) and the ragged tail-tile zero-fill path.
    batch2 = 520
    x2 = jax.random.normal(kx2, (batch2, input_dim), dtype=jnp.float32)
    y2 = simple_llm_lite_forward(x2, params)
    jax.block_until_ready(y2)
    assert y2.shape == (batch2, output_dim)
    assert jnp.allclose(y2, ref_forward(x2), atol=1e-5, rtol=1e-5)

    print("KERNEL_OK")
</pallas_src>

<mosaic_0001>
module attributes {stable_mosaic.version = 11 : i64} {
  func.func @mlp_kernel(%arg0: i32, %arg1: memref<10x128xf32, #tpu.memory_space<vmem>>, %arg2: memref<20x10xf32, #tpu.memory_space<vmem>>, %arg3: memref<20x1xf32, #tpu.memory_space<vmem>>, %arg4: memref<3x20xf32, #tpu.memory_space<vmem>>, %arg5: memref<3x1xf32, #tpu.memory_space<vmem>>, %arg6: memref<3x128xf32, #tpu.memory_space<vmem>>) attributes {dimension_semantics = [#tpu.dimension_semantics<parallel>], iteration_bounds = array<i64: 1>, scalar_prefetch = 0 : i64, scratch_operands = 0 : i64, tpu.core_type = #tpu.core_type<tc>, window_params = [{transform_indices = @transform_0, window_bounds = array<i64: 10, 128>}, {pipeline_mode = #tpu.pipeline_mode<synchronous>, transform_indices = @transform_1, window_bounds = array<i64: 20, 10>}, {pipeline_mode = #tpu.pipeline_mode<synchronous>, transform_indices = @transform_2, window_bounds = array<i64: 20, 1>}, {pipeline_mode = #tpu.pipeline_mode<synchronous>, transform_indices = @transform_3, window_bounds = array<i64: 3, 20>}, {pipeline_mode = #tpu.pipeline_mode<synchronous>, transform_indices = @transform_4, window_bounds = array<i64: 3, 1>}, {transform_indices = @transform_5, window_bounds = array<i64: 3, 128>}]} {
    %c0 = arith.constant 0 : index
    %c0_0 = arith.constant 0 : index
    %0 = vector.load %arg1[%c0, %c0_0] : memref<10x128xf32, #tpu.memory_space<vmem>>, vector<10x128xf32>
    %c0_1 = arith.constant 0 : index
    %c0_2 = arith.constant 0 : index
    %1 = vector.load %arg2[%c0_1, %c0_2] : memref<20x10xf32, #tpu.memory_space<vmem>>, vector<20x10xf32>
    %cst = arith.constant dense<0.000000e+00> : vector<20x128xf32>
    %2 = tpu.matmul %1, %0, %cst {dimension_numbers = #tpu.dot_dimension_numbers<[1], [0], [0], [1], [0, 0, 1, 1], [], []>} : vector<20x10xf32>, vector<10x128xf32>, vector<20x128xf32> -> vector<20x128xf32>
    %c0_3 = arith.constant 0 : index
    %c0_4 = arith.constant 0 : index
    %3 = vector.load %arg3[%c0_3, %c0_4] : memref<20x1xf32, #tpu.memory_space<vmem>>, vector<20x1xf32>
    %4 = vector.broadcast %3 : vector<20x1xf32> to vector<20x128xf32>
    %5 = arith.addf %2, %4 : vector<20x128xf32>
    %cst_5 = arith.constant 0.000000e+00 : f32
    %6 = vector.broadcast %cst_5 : f32 to vector<20x128xf32>
    %7 = arith.maximumf %5, %6 : vector<20x128xf32>
    %c0_6 = arith.constant 0 : index
    %c0_7 = arith.constant 0 : index
    %8 = vector.load %arg4[%c0_6, %c0_7] : memref<3x20xf32, #tpu.memory_space<vmem>>, vector<3x20xf32>
    %cst_8 = arith.constant dense<0.000000e+00> : vector<3x128xf32>
    %9 = tpu.matmul %8, %7, %cst_8 {dimension_numbers = #tpu.dot_dimension_numbers<[1], [0], [0], [1], [0, 0, 1, 1], [], []>} : vector<3x20xf32>, vector<20x128xf32>, vector<3x128xf32> -> vector<3x128xf32>
    %c0_9 = arith.constant 0 : index
    %c0_10 = arith.constant 0 : index
    %10 = vector.load %arg5[%c0_9, %c0_10] : memref<3x1xf32, #tpu.memory_space<vmem>>, vector<3x1xf32>
    %11 = vector.broadcast %10 : vector<3x1xf32> to vector<3x128xf32>
    %12 = arith.addf %9, %11 : vector<3x128xf32>
    %c0_11 = arith.constant 0 : index
    %c0_12 = arith.constant 0 : index
    %13 = vector.load %arg6[%c0_11, %c0_12] : memref<3x128xf32, #tpu.memory_space<vmem>>, vector<3x128xf32>
    tpu.vector_store %arg6[%c0_11, %c0_12], %12 {strides = array<i32>} : memref<3x128xf32, #tpu.memory_space<vmem>>, vector<3x128xf32>,
    return
  }
  func.func @transform_0(%arg0: i32) -> (i32, i32) {
    %c0_i32 = arith.constant 0 : i32
    %c0_i32_0 = arith.constant 0 : i32
    return %c0_i32, %arg0 : i32, i32
  }
  func.func @transform_1(%arg0: i32) -> (i32, i32) {
    %c0_i32 = arith.constant 0 : i32
    %c0_i32_0 = arith.constant 0 : i32
    %c0_i32_1 = arith.constant 0 : i32
    return %c0_i32, %c0_i32_0 : i32, i32
  }
  func.func @transform_2(%arg0: i32) -> (i32, i32) {
    %c0_i32 = arith.constant 0 : i32
    %c0_i32_0 = arith.constant 0 : i32
    %c0_i32_1 = arith.constant 0 : i32
    return %c0_i32, %c0_i32_0 : i32, i32
  }
  func.func @transform_3(%arg0: i32) -> (i32, i32) {
    %c0_i32 = arith.constant 0 : i32
    %c0_i32_0 = arith.constant 0 : i32
    %c0_i32_1 = arith.constant 0 : i32
    return %c0_i32, %c0_i32_0 : i32, i32
  }
  func.func @transform_4(%arg0: i32) -> (i32, i32) {
    %c0_i32 = arith.constant 0 : i32
    %c0_i32_0 = arith.constant 0 : i32
    %c0_i32_1 = arith.constant 0 : i32
    return %c0_i32, %c0_i32_0 : i32, i32
  }
  func.func @transform_5(%arg0: i32) -> (i32, i32) {
    %c0_i32 = arith.constant 0 : i32
    %c0_i32_0 = arith.constant 0 : i32
    return %c0_i32, %arg0 : i32, i32
  }
}

</mosaic_0001>

<llo_original>
// kernel: tpu_custom_call.1
$region0: #{tpu_custom_call.1}
  #allocation0 [shape = 'u32[]', space=smem, size = 0x4, offset = 0x4, fixed_abs, tag = 'smem constant byte address 0x4 - core index']
  #allocation1 [shape = 'u32[72,128]{1,0:T(1,128)}', space=vmem, size = 0x9000, scoped, tag = 'internal scratch']
  %s0 = inlined_call_operand.vmem [shape: f32[10,128], index: 0, kind: input, shape index: {}]
  %s1 = inlined_call_operand.vmem [shape: f32[20,10], index: 1, kind: input, shape index: {}]
  %s2 = inlined_call_operand.vmem [shape: f32[20,1], index: 2, kind: input, shape index: {}]
  %s3 = inlined_call_operand.vmem [shape: f32[3,20], index: 3, kind: input, shape index: {}]
  %s4 = inlined_call_operand.vmem [shape: f32[3,1], index: 4, kind: input, shape index: {}]
  %s5 = inlined_call_operand.hbm [shape: f32[3,128], index: 5, kind: output, shape index: {}]
  %s6 = sld [smem:[#allocation0]]
  $region30: #{tpu_custom_call.1} parent=0
    _
  %s8 = ssub.s32 1, %s6
  %s9 = scalar_select 0, %s8, %s6
  $region1: #{tpu_custom_call.1} parent=0
    #allocation2 [shape = 'u8[2048]{0}', space=vmem, size = 0x800, scoped, tag = 'output window, operand 0, single buffered']
    #allocation3 [shape = 's32[1]{0}', space=sflag, size = 0x4, scoped, tag = 'scoped memory for tpu_custom_call.1']
    %10 = vsyncpa [#allocation3], 0
    // Predicated region
    $region2: #{tpu_custom_call.1} parent=1 // pred_check
      _
    $region3: #{tpu_custom_call.1} parent=1 // pred_check_branch
      %12 = sbr.rel (0) target = $region5
    $region4: #{tpu_custom_call.1} parent=1 // pred_region
      _
    $region5: #{tpu_custom_call.1} parent=1 // pred_fallthru
      _
    // Predicated region
    $region6: #{tpu_custom_call.1} parent=1 // pred_check
      _
    $region7: #{tpu_custom_call.1} parent=1 // pred_check_branch
      %14 = sbr.rel (0) target = $region9
    $region8: #{tpu_custom_call.1} parent=1 // pred_region
      _
    $region9: #{tpu_custom_call.1} parent=1 // pred_fallthru
      _
    // Predicated region
    $region10: #{tpu_custom_call.1} parent=1 // pred_check
      _
    $region11: #{tpu_custom_call.1} parent=1 // pred_check_branch
      %16 = sbr.rel (0) target = $region13
    $region12: #{tpu_custom_call.1} parent=1 // pred_region
      _
    $region13: #{tpu_custom_call.1} parent=1 // pred_fallthru
      _
    // Predicated region
    $region14: #{tpu_custom_call.1} parent=1 // pred_check
      _
    $region15: #{tpu_custom_call.1} parent=1 // pred_check_branch
      %18 = sbr.rel (0) target = $region17
    $region16: #{tpu_custom_call.1} parent=1 // pred_region
      _
    $region17: #{tpu_custom_call.1} parent=1 // pred_fallthru
      _
    // Predicated region
    $region18: #{tpu_custom_call.1} parent=1 // pred_check
      _
    $region19: #{tpu_custom_call.1} parent=1 // pred_check_branch
      %20 = sbr.rel (0) target = $region21
    $region20: #{tpu_custom_call.1} parent=1 // pred_region
      _
    $region21: #{tpu_custom_call.1} parent=1 // pred_fallthru
      _
    %v21 = vld [vmem:[%s0] sm:$0xff]
    %v22 = vld [vmem:[%s0 + $0x8] sm:$0x3]
    %v23 = vld [vmem:[%s1] sm:$0xff]
    %v24 = vld [vmem:[%s1 + $0x8] sm:$0xff]
    %v25 = vld [vmem:[%s1 + $0x10] sm:$0xf]
    %v26 = vld [vmem:[%s2] sm:$0xff]
    %v27 = vld [vmem:[%s2 + $0x8] sm:$0xff]
    %v28 = vld [vmem:[%s2 + $0x10] sm:$0xf]
    %30 = vset.pattern.permute.xlu0 0
    %31 = vperm.xlu0 %30, %v26
    %v32 = vpop.permute.xlu0 %31
    %35 = vset.pattern.permute.xlu0 0
    %36 = vperm.xlu0 %35, %v27
    %v37 = vpop.permute.xlu0 %36
    %40 = vset.pattern.permute.xlu0 0
    %41 = vperm.xlu0 %40, %v28
    %v42 = vpop.permute.xlu0 %41
    %vm44 = vcmask 80896
    %v46 = vsel %vm44, %v23, 0
    %v49 = vsel %vm44, %v24, 0
    %v52 = vsel %vm44, %v25, 0
    %vm54 = vcmask 1041408
    %v56 = vsel %vm54, %v22, 0
    %58 = vmatpush.msra.mxu0 0.0
    %59 = vmatpush.msra.mxu0 0.0
    %60 = vmatpush.msra.mxu0 0.0
    %61 = vmatpush.msra.mxu0 0.0
    %62 = vmatpush.msra.mxu0 0.0
    %63 = vmatpush.msra.mxu0 0.0
    %64 = vmatpush.msra.mxu0 0.0
    %65 = vmatpush.msra.mxu0 0.0
    %66 = vmatpush.msra.mxu0 0.0
    %67 = vmatpush.msra.mxu0 0.0
    %68 = vmatpush.msra.mxu0 0.0
    %69 = vmatpush.msra.mxu0 0.0
    %70 = vmatpush.msra.mxu0 0.0
    %71 = vmatpush.msra.mxu0 0.0
    %72 = vmatpush.msra.mxu0 %v56
    %73 = vmatpush.msra.mxu0 %v21
    %74 = vmatmul.f32.gmra.mxu0 %v46
    %v75 = vpop.f32.mrf.mxu0
    %v76 = vadd.f32 %v32, %v75
    %77 = vmatmul.f32.gmra.mxu0 %v49
    %v78 = vpop.f32.mrf.mxu0
    %v79 = vadd.f32 %v37, %v78
    %80 = vmatmul.f32.gmra.mxu0 %v52
    %v81 = vpop.f32.mrf.mxu0
    %v82 = vadd.f32 %v42, %v81
    %83 = vdwg.mxu0
    %v84 = vmax.f32 %v76, 0.0
    %v85 = vmax.f32 %v79, 0.0
    %v86 = vmax.f32 %v82, 0.0
    %v87 = vld [vmem:[%s3] sm:$0x7]
    %v88 = vld [vmem:[%s4] sm:$0x7]
    %90 = vset.pattern.permute.xlu0 0
    %91 = vperm.xlu0 %90, %v88
    %v92 = vpop.permute.xlu0 %91
    %vm94 = vcmask 162816
    %v96 = vsel %vm94, %v87, 0
    %vm98 = vcmask 1043456
    %v100 = vsel %vm98, %v86, 0
    %102 = vmatpush.msra.mxu0 0.0
    %103 = vmatpush.msra.mxu0 0.0
    %104 = vmatpush.msra.mxu0 0.0
    %105 = vmatpush.msra.mxu0 0.0
    %106 = vmatpush.msra.mxu0 0.0
    %107 = vmatpush.msra.mxu0 0.0
    %108 = vmatpush.msra.mxu0 0.0
    %109 = vmatpush.msra.mxu0 0.0
    %110 = vmatpush.msra.mxu0 0.0
    %111 = vmatpush.msra.mxu0 0.0
    %112 = vmatpush.msra.mxu0 0.0
    %113 = vmatpush.msra.mxu0 0.0
    %114 = vmatpush.msra.mxu0 0.0
    %115 = vmatpush.msra.mxu0 %v100
    %116 = vmatpush.msra.mxu0 %v85
    %117 = vmatpush.msra.mxu0 %v84
    %118 = vmatmul.f32.gmra.mxu0 %v96
    %v119 = vpop.f32.mrf.mxu0
    %v120 = vadd.f32 %v92, %v119
    %121 = vdwg.mxu0
    %122 = vst [vmem:[#allocation2] sm:$0x7] %v120
    // Predicated region
    $region22: #{tpu_custom_call.1} parent=1 // pred_check
      _
    $region23: #{tpu_custom_call.1} parent=1 // pred_check_branch
      %124 = sbr.rel (0) target = $region25
    $region24: #{tpu_custom_call.1} parent=1 // pred_region
      %126 = vsyncadd [#allocation3], 0
      %s128 = sshll.u32 [#allocation2], 4
      %s129 = int_to_ptr.vmem [resolvable:$true] %s128
      %s130 = sshll.u32 %s5, 4
      %s131 = int_to_ptr.hbm [resolvable:$true] %s130
      %133 = dma.vmem_to_hbm [thread:$0]  %s129, 64, %s131, [#allocation3]
    $region25: #{tpu_custom_call.1} parent=1 // pred_fallthru
      _
    // Predicated region
    $region26: #{tpu_custom_call.1} parent=1 // pred_check
      _
    $region27: #{tpu_custom_call.1} parent=1 // pred_check_branch
      %135 = sbr.rel (0) target = $region29
    $region28: #{tpu_custom_call.1} parent=1 // pred_region
      %137 = dma.done [#allocation3], 64
    $region29: #{tpu_custom_call.1} parent=1 // pred_fallthru
      _
    %138 = vsyncpa [#allocation3], 1

</llo_original>
